<compile_context>
chip_gen: v7x
topology: tpu7x:2x2x1
jax: 0.10.0
libtpu: 0.0.40
codegen_flags: <defaults>
</compile_context>

<pallas_src>
import jax
import jax.numpy as jnp
from jax.experimental import pallas as pl
from jax.experimental.pallas import tpu as pltpu


def _policy_broadcast_kernel(policy_ref, policy_out_ref):
    # policy_ref:     (1, CHW)  -- resident learned constant (lane-dense)
    # policy_out_ref: (TB, CHW) -- full-width stores, no lane masking
    policy_out_ref[...] = jnp.broadcast_to(
        policy_ref[...], policy_out_ref.shape
    ).astype(policy_out_ref.dtype)


def constant_network_forward(x, scalars_param, policy_param):
    """x: (B, ...) -- only the batch size is used, mirroring the PyTorch forward."""
    B = x.shape[0]
    _, C, H, W = policy_param.shape
    CHW = C * H * W

    # Scalars: zero-FLOP batch expand -> leave to XLA (metadata-only broadcast,
    # fuses into downstream consumers; avoids a 5/128-lane masked-store output
    # pipeline in the kernel).
    scalars = jnp.broadcast_to(scalars_param, (B, 5)).astype(scalars_param.dtype)

    # Policy: flatten to a lane-dense (1, C*H*W) slab before the kernel.
    policy_flat_param = policy_param.reshape(1, CHW)

    # Batch tile: largest block that keeps per-output buffers ~1 MiB (fits the
    # scoped VMEM on v5e/v7x with double buffering) while satisfying the
    # (8, 128) rule: either TB == B (full dim) or TB % 8 == 0.
    TB = B if B <= 1024 else 1024
    grid = (pl.cdiv(B, TB),)

    policy_flat = pl.pallas_call(
        _policy_broadcast_kernel,
        out_shape=jax.ShapeDtypeStruct((B, CHW), policy_param.dtype),
        grid=grid,
        in_specs=[
            # Constant input: same (0, 0) block every step -> stays resident.
            pl.BlockSpec((1, CHW), lambda i: (0, 0)),
        ],
        out_specs=pl.BlockSpec((TB, CHW), lambda i: (i, 0)),
        compiler_params=pltpu.CompilerParams(
            # Batch axis is embarrassingly parallel -> shard across both
            # TensorCores on v7x; no-op on single-TC v5e/v6e.
            dimension_semantics=("parallel",),
        ),
    )(policy_flat_param)

    # Reshape back to NCHW outside the kernel (layout plumbing, fused by XLA).
    policy = policy_flat.reshape(B, C, H, W)
    return scalars, policy


if __name__ == "__main__":
    key = jax.random.PRNGKey(0)
    k_scalars, k_policy, k_x = jax.random.split(key, 3)

    # Deterministic "torch.randn"-style parameter init.
    policy_shape = (4, 8, 8)  # game.policy_shape (C, H, W)
    scalars_param = jax.random.normal(k_scalars, (1, 5), dtype=jnp.float32)
    policy_param = jax.random.normal(k_policy, (1, *policy_shape), dtype=jnp.float32)

    # Example input: NCHW; only the batch dim matters for the forward pass.
    x = jax.random.normal(k_x, (2, 4, 16, 16), dtype=jnp.float32)

    scalars, policy = constant_network_forward(x, scalars_param, policy_param)
    jax.block_until_ready((scalars, policy))

    # Reference check: pure-JAX broadcast (what torch .expand does).
    ref_scalars = jnp.broadcast_to(scalars_param, (x.shape[0], 5))
    ref_policy = jnp.broadcast_to(policy_param, (x.shape[0], *policy_shape))
    assert scalars.shape == (2, 5) and policy.shape == (2, 4, 8, 8)
    assert jnp.allclose(scalars, ref_scalars)
    assert jnp.allclose(policy, ref_policy)

    print("KERNEL_OK")
</pallas_src>

<mosaic_0001>
module attributes {stable_mosaic.version = 11 : i64} {
  func.func @_policy_broadcast_kernel(%arg0: i32, %arg1: memref<1x256xf32, #tpu.memory_space<vmem>>, %arg2: memref<2x256xf32, #tpu.memory_space<vmem>>) attributes {dimension_semantics = [#tpu.dimension_semantics<parallel>], iteration_bounds = array<i64: 1>, scalar_prefetch = 0 : i64, scratch_operands = 0 : i64, tpu.core_type = #tpu.core_type<tc>, window_params = [{pipeline_mode = #tpu.pipeline_mode<synchronous>, transform_indices = @transform_0, window_bounds = array<i64: 1, 256>}, {transform_indices = @transform_1, window_bounds = array<i64: 2, 256>}]} {
    %c0 = arith.constant 0 : index
    %c0_0 = arith.constant 0 : index
    %0 = vector.load %arg1[%c0, %c0_0] : memref<1x256xf32, #tpu.memory_space<vmem>>, vector<1x256xf32>
    %1 = vector.shape_cast %0 : vector<1x256xf32> to vector<1x256xf32>
    %2 = vector.broadcast %1 : vector<1x256xf32> to vector<2x256xf32>
    %c0_1 = arith.constant 0 : index
    %c0_2 = arith.constant 0 : index
    %3 = vector.load %arg2[%c0_1, %c0_2] : memref<2x256xf32, #tpu.memory_space<vmem>>, vector<2x256xf32>
    tpu.vector_store %arg2[%c0_1, %c0_2], %2 {strides = array<i32>} : memref<2x256xf32, #tpu.memory_space<vmem>>, vector<2x256xf32>,
    return
  }
  func.func @transform_0(%arg0: i32) -> (i32, i32) {
    %c0_i32 = arith.constant 0 : i32
    %c0_i32_0 = arith.constant 0 : i32
    %c0_i32_1 = arith.constant 0 : i32
    return %c0_i32, %c0_i32_0 : i32, i32
  }
  func.func @transform_1(%arg0: i32) -> (i32, i32) {
    %c0_i32 = arith.constant 0 : i32
    %c0_i32_0 = arith.constant 0 : i32
    return %arg0, %c0_i32 : i32, i32
  }
}

</mosaic_0001>

<llo_original>
// kernel: tpu_custom_call.1
$region0: #{tpu_custom_call.1}
  #allocation0 [shape = 'u32[]', space=smem, size = 0x4, offset = 0x4, fixed_abs, tag = 'smem constant byte address 0x4 - core index']
  #allocation1 [shape = 'u32[144,128]{1,0:T(1,128)}', space=vmem, size = 0x12000, scoped, tag = 'internal scratch']
  %s0 = inlined_call_operand.hbm [shape: f32[1,256], index: 0, kind: input, shape index: {}]
  %s1 = inlined_call_operand.hbm [shape: f32[2,256], index: 1, kind: output, shape index: {}]
  %s2 = sld [smem:[#allocation0]]
  $region18: #{tpu_custom_call.1} parent=0
    _
  %s4 = ssub.s32 1, %s2
  %s5 = scalar_select 0, %s4, %s2
  $region1: #{tpu_custom_call.1} parent=0
    #allocation2 [shape = 'u8[1024]{0}', space=vmem, size = 0x400, scoped, tag = 'input window, operand 0, single buffered']
    #allocation3 [shape = 's32[1]{0}', space=sflag, size = 0x4, scoped, tag = 'scoped memory for tpu_custom_call.1']
    #allocation4 [shape = 's32[1]{0}', space=sflag, size = 0x4, scoped, tag = 'scoped memory for tpu_custom_call.1']
    #allocation5 [shape = 'u8[2048]{0}', space=vmem, size = 0x800, scoped, tag = 'output window, operand 0, single buffered']
    %6 = vsyncpa [#allocation3], 0
    %7 = vsyncpa [#allocation4], 0
    // Predicated region
    $region2: #{tpu_custom_call.1} parent=1 // pred_check
      _
    $region3: #{tpu_custom_call.1} parent=1 // pred_check_branch
      %9 = sbr.rel (0) target = $region5
    $region4: #{tpu_custom_call.1} parent=1 // pred_region
      %s11 = ssub.s32 32, 32
      %12 = vsyncadd [#allocation3], %s11
      %s14 = sshll.u32 [#allocation2], 4
      %s15 = int_to_ptr.vmem [resolvable:$true] %s14
      %17 = dma.hbm_to_vmem [thread:$0]  %s0, 32, %s15, [#allocation3]
    $region5: #{tpu_custom_call.1} parent=1 // pred_fallthru
      _
    // Predicated region
    $region6: #{tpu_custom_call.1} parent=1 // pred_check
      _
    $region7: #{tpu_custom_call.1} parent=1 // pred_check_branch
      %19 = sbr.rel (0) target = $region9
    $region8: #{tpu_custom_call.1} parent=1 // pred_region
      %20 = dma.done [#allocation3], 32
    $region9: #{tpu_custom_call.1} parent=1 // pred_fallthru
      _
    %v21 = vld [vmem:[#allocation2] sm:$0x3]
    %v23 = vlaneseq
    %v24 = vshrl.u32 %v23, 7
    %v25 = vsub.s32 0, %v24
    %v26 = vrot.slane %v21, %v25
    %v27 = vlaneseq
    %v28 = vshrl.u32 %v27, 7
    %v29 = vsub.s32 1, %v28
    %v30 = vrot.slane %v21, %v29
    %v31 = vcombine.low %v26, %v30
    %v33 = vunpack.c.l.s4 1983009808
    %v34 = vunpack.c.0.s8 %v33
    %v35 = vlaneseq
    %v36 = vshrl.u32 %v35, 7
    %v37 = vsub.s32 %v34, %v36
    %v38 = vrot.slane %v31, %v37
    %40 = vst [vmem:[#allocation5] sm:$0xf] %v38
    // Predicated region
    $region10: #{tpu_custom_call.1} parent=1 // pred_check
      _
    $region11: #{tpu_custom_call.1} parent=1 // pred_check_branch
      %42 = sbr.rel (0) target = $region13
    $region12: #{tpu_custom_call.1} parent=1 // pred_region
      %s44 = ssub.s32 64, 64
      %45 = vsyncadd [#allocation4], %s44
      %s47 = sshll.u32 [#allocation5], 4
      %s48 = int_to_ptr.vmem [resolvable:$true] %s47
      %50 = dma.vmem_to_hbm [thread:$0]  %s48, 64, %s1, [#allocation4]
    $region13: #{tpu_custom_call.1} parent=1 // pred_fallthru
      _
    // Predicated region
    $region14: #{tpu_custom_call.1} parent=1 // pred_check
      _
    $region15: #{tpu_custom_call.1} parent=1 // pred_check_branch
      %52 = sbr.rel (0) target = $region17
    $region16: #{tpu_custom_call.1} parent=1 // pred_region
      %53 = dma.done [#allocation4], 64
    $region17: #{tpu_custom_call.1} parent=1 // pred_fallthru
      _
    %54 = vsyncpa [#allocation3], 1
    %55 = vsyncpa [#allocation4], 1

</llo_original>
